<compile_context>
chip_gen: v7x
topology: tpu7x:2x2x1
jax: 0.10.0
libtpu: 0.0.40
codegen_flags: <defaults>
</compile_context>

<pallas_src>
import jax
import jax.numpy as jnp
from jax.experimental import pallas as pl
from jax.experimental.pallas import tpu as pltpu

LANE = 128   # lane width: last-dim tiling quantum
SUBLANE = 8  # sublane quantum: second-to-last dim


def _round_up(x, m):
    return ((x + m - 1) // m) * m


def gcn_agg_kernel(adj_ref, xw_ref, b_ref, out_ref, acc_ref):
    """out[i] = (sum_k A[i, k] @ XW[k]) + b, with f32 VMEM accumulation."""
    k = pl.program_id(1)

    @pl.when(k == 0)
    def _():
        acc_ref[...] = jnp.zeros_like(acc_ref)

    acc_ref[...] += jnp.dot(adj_ref[...], xw_ref[...],
                            preferred_element_type=jnp.float32)

    @pl.when(k == pl.num_programs(1) - 1)
    def _():
        out_ref[...] = (acc_ref[...] + b_ref[...]).astype(out_ref.dtype)


def gcn_layer(adj, x, w, b, *, tm=256, tk=512, compute_dtype=jnp.bfloat16):
    """GCN layer forward: (A @ X) @ W.T + b, computed as A @ (X @ W.T) + b.

    adj: (N, N) dense adjacency, adj[dst, src] = 1.0 iff edge src->dst
    x:   (N, F_in) node features
    w:   (F_out, F_in) torch Linear weight layout
    b:   (F_out,) bias
    """
    N = adj.shape[0]
    f_out = w.shape[0]

    # Hoisted projection: computed once, outside the grid loop (plain XLA).
    xw = jnp.dot(x, w.T, preferred_element_type=jnp.float32)  # (N, F_out) f32

    # Pad output-feature axis to a full lane width for unmasked stores.
    f_pad = _round_up(max(f_out, LANE), LANE)

    # Clamp tiles to the (padded) problem size, keep (8, 128) alignment.
    tm = _round_up(max(SUBLANE, min(tm, _round_up(N, SUBLANE))), SUBLANE)
    tk = _round_up(max(LANE, min(tk, _round_up(N, LANE))), LANE)

    # Pad dst (rows) and src (K) axes so the grid divides evenly.  Zero
    # padding is exact: padded adjacency columns hit zero XW rows, and padded
    # dst rows are sliced off below.
    n_rows = _round_up(N, tm)
    n_src = _round_up(N, tk)

    adj_p = jnp.zeros((n_rows, n_src), dtype=compute_dtype)
    adj_p = adj_p.at[:N, :N].set(adj.astype(compute_dtype))  # 0/1 -> lossless
    xw_p = jnp.zeros((n_src, f_pad), dtype=compute_dtype)
    xw_p = xw_p.at[:N, :f_out].set(xw.astype(compute_dtype))
    b_p = jnp.zeros((1, f_pad), dtype=jnp.float32)
    b_p = b_p.at[0, :f_out].set(b.astype(jnp.float32))

    grid = (n_rows // tm, n_src // tk)

    # Double-buffered VMEM footprint estimate -> raise scoped limit with
    # headroom, capped well under v7x's 64 MiB physical VMEM.
    itm = jnp.dtype(compute_dtype).itemsize
    vmem_bytes = (2 * tm * tk * itm        # adjacency tiles (double-buffered)
                  + 2 * tk * f_pad * itm   # XW K-strips
                  + 2 * tm * f_pad * 4     # output tiles
                  + tm * f_pad * 4         # f32 accumulator
                  + f_pad * 4)             # bias
    vmem_limit = int(min(max(2 * vmem_bytes, 32 * 1024 * 1024),
                         48 * 1024 * 1024))

    out_padded = pl.pallas_call(
        gcn_agg_kernel,
        out_shape=jax.ShapeDtypeStruct((n_rows, f_pad), jnp.float32),
        grid_spec=pltpu.PrefetchScalarGridSpec(
            num_scalar_prefetch=0,
            grid=grid,
            in_specs=[
                pl.BlockSpec((tm, tk), lambda i, k: (i, k)),      # A row/K tile
                pl.BlockSpec((tk, f_pad), lambda i, k: (k, 0)),   # XW K-strip
                pl.BlockSpec((1, f_pad), lambda i, k: (0, 0)),    # bias
            ],
            out_specs=pl.BlockSpec((tm, f_pad), lambda i, k: (i, 0)),
            scratch_shapes=[pltpu.VMEM((tm, f_pad), jnp.float32)],
        ),
        compiler_params=pltpu.CompilerParams(
            dimension_semantics=("parallel", "arbitrary"),
            vmem_limit_bytes=vmem_limit,
        ),
    )(adj_p, xw_p, b_p)

    # Drop row / lane padding outside the kernel.
    return out_padded[:N, :f_out]


if __name__ == "__main__":
    key = jax.random.PRNGKey(0)
    k_adj, k_x, k_w, k_b = jax.random.split(key, 4)

    N = 64          # number of graph nodes
    in_feats = 32
    out_feats = 16

    # Deterministic synthetic graph: random directed edges, p=0.3.
    adj = jax.random.bernoulli(k_adj, p=0.3, shape=(N, N)).astype(jnp.float32)

    # Node features.
    x = jax.random.normal(k_x, (N, in_feats), dtype=jnp.float32)

    # torch.nn.Linear default init: U(-1/sqrt(in_feats), 1/sqrt(in_feats))
    bound = 1.0 / (in_feats ** 0.5)
    w = jax.random.uniform(k_w, (out_feats, in_feats), minval=-bound,
                           maxval=bound, dtype=jnp.float32)
    b = jax.random.uniform(k_b, (out_feats,), minval=-bound, maxval=bound,
                           dtype=jnp.float32)

    out = gcn_layer(adj, x, w, b)
    out = jax.block_until_ready(out)
    assert out.shape == (N, out_feats)

    # Matched-precision reference: XW rounded to bf16, aggregation exact
    # (A is 0/1, accumulation in f32) -> should agree tightly.
    xw_bf = (x @ w.T).astype(jnp.bfloat16).astype(jnp.float32)
    ref_bf = adj @ xw_bf + b
    assert jnp.allclose(out, ref_bf, atol=1e-3, rtol=1e-3), \
        float(jnp.max(jnp.abs(out - ref_bf)))

    # Exact f32 reference (same math as the PyTorch module); loose tolerance
    # only covers the bf16 rounding of XW.
    ref = (adj @ x) @ w.T + b
    assert jnp.allclose(out, ref, atol=5e-2, rtol=5e-2), \
        float(jnp.max(jnp.abs(out - ref)))

    print("KERNEL_OK")
</pallas_src>

<mosaic_0001>
module attributes {stable_mosaic.version = 11 : i64} {
  func.func @gcn_agg_kernel(%arg0: i32, %arg1: i32, %arg2: memref<64x128xbf16, #tpu.memory_space<vmem>>, %arg3: memref<128x128xbf16, #tpu.memory_space<vmem>>, %arg4: memref<1x128xf32, #tpu.memory_space<vmem>>, %arg5: memref<64x128xf32, #tpu.memory_space<vmem>>, %arg6: memref<64x128xf32, #tpu.memory_space<vmem>>) attributes {dimension_semantics = [#tpu.dimension_semantics<parallel>, #tpu.dimension_semantics<arbitrary>], iteration_bounds = array<i64: 1, 1>, scalar_prefetch = 0 : i64, scratch_operands = 1 : i64, tpu.core_type = #tpu.core_type<tc>, window_params = [{transform_indices = @transform_0, window_bounds = array<i64: 64, 128>}, {transform_indices = @transform_1, window_bounds = array<i64: 128, 128>}, {pipeline_mode = #tpu.pipeline_mode<synchronous>, transform_indices = @transform_2, window_bounds = array<i64: 1, 128>}, {transform_indices = @transform_3, window_bounds = array<i64: 64, 128>}]} {
    %c0_i32 = arith.constant 0 : i32
    %0 = arith.cmpi eq, %arg1, %c0_i32 : i32
    %1 = arith.extui %0 : i1 to i32
    %c0_i32_0 = arith.constant 0 : i32
    %2 = arith.cmpi ne, %1, %c0_i32_0 : i32
    scf.if %2 {
      %cst_10 = arith.constant 0.000000e+00 : f32
      %12 = vector.broadcast %cst_10 : f32 to vector<64x128xf32>
      %c0_11 = arith.constant 0 : index
      %c0_12 = arith.constant 0 : index
      %13 = vector.load %arg6[%c0_11, %c0_12] : memref<64x128xf32, #tpu.memory_space<vmem>>, vector<64x128xf32>
      tpu.vector_store %arg6[%c0_11, %c0_12], %12 {strides = array<i32>} : memref<64x128xf32, #tpu.memory_space<vmem>>, vector<64x128xf32>,
    } else {
    }
    %c0 = arith.constant 0 : index
    %c0_1 = arith.constant 0 : index
    %3 = vector.load %arg6[%c0, %c0_1] : memref<64x128xf32, #tpu.memory_space<vmem>>, vector<64x128xf32>
    %c0_2 = arith.constant 0 : index
    %c0_3 = arith.constant 0 : index
    %4 = vector.load %arg2[%c0_2, %c0_3] : memref<64x128xbf16, #tpu.memory_space<vmem>>, vector<64x128xbf16>
    %c0_4 = arith.constant 0 : index
    %c0_5 = arith.constant 0 : index
    %5 = vector.load %arg3[%c0_4, %c0_5] : memref<128x128xbf16, #tpu.memory_space<vmem>>, vector<128x128xbf16>
    %cst = arith.constant dense<0.000000e+00> : vector<64x128xf32>
    %6 = tpu.matmul %4, %5, %cst {dimension_numbers = #tpu.dot_dimension_numbers<[1], [0], [0], [1], [0, 0, 1, 1], [], []>} : vector<64x128xbf16>, vector<128x128xbf16>, vector<64x128xf32> -> vector<64x128xf32>
    %7 = arith.addf %3, %6 : vector<64x128xf32>
    %c0_6 = arith.constant 0 : index
    %c0_7 = arith.constant 0 : index
    %8 = vector.load %arg6[%c0_6, %c0_7] : memref<64x128xf32, #tpu.memory_space<vmem>>, vector<64x128xf32>
    tpu.vector_store %arg6[%c0_6, %c0_7], %7 {strides = array<i32>} : memref<64x128xf32, #tpu.memory_space<vmem>>, vector<64x128xf32>,
    %c0_i32_8 = arith.constant 0 : i32
    %9 = arith.cmpi eq, %arg1, %c0_i32_8 : i32
    %10 = arith.extui %9 : i1 to i32
    %c0_i32_9 = arith.constant 0 : i32
    %11 = arith.cmpi ne, %10, %c0_i32_9 : i32
    scf.if %11 {
      %c0_10 = arith.constant 0 : index
      %c0_11 = arith.constant 0 : index
      %12 = vector.load %arg6[%c0_10, %c0_11] : memref<64x128xf32, #tpu.memory_space<vmem>>, vector<64x128xf32>
      %c0_12 = arith.constant 0 : index
      %c0_13 = arith.constant 0 : index
      %13 = vector.load %arg4[%c0_12, %c0_13] : memref<1x128xf32, #tpu.memory_space<vmem>>, vector<1x128xf32>
      %14 = vector.broadcast %13 : vector<1x128xf32> to vector<64x128xf32>
      %15 = arith.addf %12, %14 : vector<64x128xf32>
      %c0_14 = arith.constant 0 : index
      %c0_15 = arith.constant 0 : index
      %16 = vector.load %arg5[%c0_14, %c0_15] : memref<64x128xf32, #tpu.memory_space<vmem>>, vector<64x128xf32>
      tpu.vector_store %arg5[%c0_14, %c0_15], %15 {strides = array<i32>} : memref<64x128xf32, #tpu.memory_space<vmem>>, vector<64x128xf32>,
    } else {
    }
    return
  }
  func.func @transform_0(%arg0: i32, %arg1: i32) -> (i32, i32) {
    %c0_i32 = arith.constant 0 : i32
    return %arg0, %arg1 : i32, i32
  }
  func.func @transform_1(%arg0: i32, %arg1: i32) -> (i32, i32) {
    %c0_i32 = arith.constant 0 : i32
    %c0_i32_0 = arith.constant 0 : i32
    return %arg1, %c0_i32 : i32, i32
  }
  func.func @transform_2(%arg0: i32, %arg1: i32) -> (i32, i32) {
    %c0_i32 = arith.constant 0 : i32
    %c0_i32_0 = arith.constant 0 : i32
    %c0_i32_1 = arith.constant 0 : i32
    return %c0_i32, %c0_i32_0 : i32, i32
  }
  func.func @transform_3(%arg0: i32, %arg1: i32) -> (i32, i32) {
    %c0_i32 = arith.constant 0 : i32
    %c0_i32_0 = arith.constant 0 : i32
    return %arg0, %c0_i32 : i32, i32
  }
}

</mosaic_0001>

<llo_original>
// kernel: tpu_custom_call.1
$region0: #{tpu_custom_call.1}
  #allocation0 [shape = 'u32[]', space=smem, size = 0x4, offset = 0x4, fixed_abs, tag = 'smem constant byte address 0x4 - core index']
  #allocation1 [shape = 'u32[144,128]{1,0:T(1,128)}', space=vmem, size = 0x12000, scoped, tag = 'internal scratch']
  #allocation2 [shape = 'f32[64,128]{1,0:T(8,128)}', space=vmem, size = 0x8000, scoped, tag = 'scratch operand']
  %s0 = inlined_call_operand.hbm [shape: bf16[64,128], index: 0, kind: input, shape index: {}]
  %s1 = inlined_call_operand.hbm [shape: bf16[128,128], index: 1, kind: input, shape index: {}]
  %s2 = inlined_call_operand.vmem [shape: f32[1,128], index: 2, kind: input, shape index: {}]
  %s3 = inlined_call_operand.hbm [shape: f32[64,128], index: 3, kind: output, shape index: {}]
  %s4 = sld [smem:[#allocation0]]
  $region38: #{tpu_custom_call.1} parent=0
    _
  %s6 = ssub.s32 1, %s4
  %s7 = scalar_select 0, %s6, %s4
  $region1: #{tpu_custom_call.1} parent=0
    #allocation3 [shape = 'u8[16384]{0}', space=vmem, size = 0x4000, scoped, tag = 'input window, operand 0, single buffered']
    #allocation4 [shape = 's32[1]{0}', space=sflag, size = 0x4, scoped, tag = 'scoped memory for tpu_custom_call.1']
    #allocation5 [shape = 's32[1]{0}', space=sflag, size = 0x4, scoped, tag = 'scoped memory for tpu_custom_call.1']
    #allocation6 [shape = 'u8[32768]{0}', space=vmem, size = 0x8000, scoped, tag = 'input window, operand 1, single buffered']
    #allocation7 [shape = 's32[1]{0}', space=sflag, size = 0x4, scoped, tag = 'scoped memory for tpu_custom_call.1']
    #allocation8 [shape = 'u8[32768]{0}', space=vmem, size = 0x8000, scoped, tag = 'output window, operand 0, single buffered']
    %8 = vsyncpa [#allocation4], 0
    %9 = vsyncpa [#allocation7], 0
    %10 = vsyncpa [#allocation5], 0
    // Predicated region
    $region2: #{tpu_custom_call.1} parent=1 // pred_check
      _
    $region3: #{tpu_custom_call.1} parent=1 // pred_check_branch
      %12 = sbr.rel (0) target = $region5
    $region4: #{tpu_custom_call.1} parent=1 // pred_region
      %s14 = ssub.s32 512, 512
      %15 = vsyncadd [#allocation4], %s14
      %s16 = sshll.u32 [#allocation3], 4
      %s17 = int_to_ptr.vmem [resolvable:$true] %s16
      %22 = dma.hbm_to_vmem [thread:$0]  %s0, 512, %s17, [#allocation4], 64, 64, 4
    $region5: #{tpu_custom_call.1} parent=1 // pred_fallthru
      _
    // Predicated region
    $region6: #{tpu_custom_call.1} parent=1 // pred_check
      _
    $region7: #{tpu_custom_call.1} parent=1 // pred_check_branch
      %24 = sbr.rel (0) target = $region9
    $region8: #{tpu_custom_call.1} parent=1 // pred_region
      %s26 = ssub.s32 1024, 1024
      %27 = vsyncadd [#allocation7], %s26
      %s28 = sshll.u32 [#allocation6], 4
      %s29 = int_to_ptr.vmem [resolvable:$true] %s28
      %34 = dma.hbm_to_vmem [thread:$0]  %s1, 1024, %s29, [#allocation7], 64, 64, 4
    $region9: #{tpu_custom_call.1} parent=1 // pred_fallthru
      _
    // Predicated region
    $region10: #{tpu_custom_call.1} parent=1 // pred_check
      _
    $region11: #{tpu_custom_call.1} parent=1 // pred_check_branch
      %36 = sbr.rel (0) target = $region13
    $region12: #{tpu_custom_call.1} parent=1 // pred_region
      _
    $region13: #{tpu_custom_call.1} parent=1 // pred_fallthru
      _
    // Predicated region
    $region14: #{tpu_custom_call.1} parent=1 // pred_check
      _
    $region15: #{tpu_custom_call.1} parent=1 // pred_check_branch
      %38 = sbr.rel (0) target = $region17
    $region16: #{tpu_custom_call.1} parent=1 // pred_region
      %39 = dma.done [#allocation4], 512
    $region17: #{tpu_custom_call.1} parent=1 // pred_fallthru
      _
    // Predicated region
    $region18: #{tpu_custom_call.1} parent=1 // pred_check
      _
    $region19: #{tpu_custom_call.1} parent=1 // pred_check_branch
      %41 = sbr.rel (0) target = $region21
    $region20: #{tpu_custom_call.1} parent=1 // pred_region
      %42 = dma.done [#allocation7], 1024
    $region21: #{tpu_custom_call.1} parent=1 // pred_fallthru
      _
    %p44 = scmp.eq.s32.totalorder 0, 0
    // Predicated region
    $region22: #{tpu_custom_call.1} parent=1 // pred_check
      %p45 = pneg %p44
    $region23: #{tpu_custom_call.1} parent=1 // pred_check_branch
      %47 = sbr.rel (%p45) target = $region25
    $region24: #{tpu_custom_call.1} parent=1 // pred_region
      %48 = vst [vmem:[#allocation2] sm:$0xff] 0.0
      %49 = vst [vmem:[#allocation2 + $0x8] sm:$0xff] 0.0
      %50 = vst [vmem:[#allocation2 + $0x10] sm:$0xff] 0.0
      %51 = vst [vmem:[#allocation2 + $0x18] sm:$0xff] 0.0
      %52 = vst [vmem:[#allocation2 + $0x20] sm:$0xff] 0.0
      %53 = vst [vmem:[#allocation2 + $0x28] sm:$0xff] 0.0
      %54 = vst [vmem:[#allocation2 + $0x30] sm:$0xff] 0.0
      %55 = vst [vmem:[#allocation2 + $0x38] sm:$0xff] 0.0
    $region25: #{tpu_custom_call.1} parent=1 // pred_fallthru
      _
    %v56 = vld [vmem:[#allocation2] sm:$0xff]
    %v57 = vld [vmem:[#allocation2 + $0x8] sm:$0xff]
    %v58 = vld [vmem:[#allocation2 + $0x10] sm:$0xff]
    %v59 = vld [vmem:[#allocation2 + $0x18] sm:$0xff]
    %v60 = vld [vmem:[#allocation2 + $0x20] sm:$0xff]
    %v61 = vld [vmem:[#allocation2 + $0x28] sm:$0xff]
    %v62 = vld [vmem:[#allocation2 + $0x30] sm:$0xff]
    %v63 = vld [vmem:[#allocation2 + $0x38] sm:$0xff]
    %v64 = vld [vmem:[#allocation3] sm:$0xf]
    %v65 = vld [vmem:[#allocation3 + $0x4] sm:$0xf]
    %v66 = vld [vmem:[#allocation3 + $0x8] sm:$0xf]
    %v67 = vld [vmem:[#allocation3 + $0xc] sm:$0xf]
    %v68 = vld [vmem:[#allocation3 + $0x10] sm:$0xf]
    %v69 = vld [vmem:[#allocation3 + $0x14] sm:$0xf]
    %v70 = vld [vmem:[#allocation3 + $0x18] sm:$0xf]
    %v71 = vld [vmem:[#allocation3 + $0x1c] sm:$0xf]
    %v72 = vld [vmem:[#allocation6] sm:$0xf]
    %v73 = vld [vmem:[#allocation6 + $0x4] sm:$0xf]
    %v74 = vld [vmem:[#allocation6 + $0x8] sm:$0xf]
    %v75 = vld [vmem:[#allocation6 + $0xc] sm:$0xf]
    %v76 = vld [vmem:[#allocation6 + $0x10] sm:$0xf]
    %v77 = vld [vmem:[#allocation6 + $0x14] sm:$0xf]
    %v78 = vld [vmem:[#allocation6 + $0x18] sm:$0xf]
    %v79 = vld [vmem:[#allocation6 + $0x1c] sm:$0xf]
    %v80 = vld [vmem:[#allocation6 + $0x20] sm:$0xf]
    %v81 = vld [vmem:[#allocation6 + $0x24] sm:$0xf]
    %v82 = vld [vmem:[#allocation6 + $0x28] sm:$0xf]
    %v83 = vld [vmem:[#allocation6 + $0x2c] sm:$0xf]
    %v84 = vld [vmem:[#allocation6 + $0x30] sm:$0xf]
    %v85 = vld [vmem:[#allocation6 + $0x34] sm:$0xf]
    %v86 = vld [vmem:[#allocation6 + $0x38] sm:$0xf]
    %v87 = vld [vmem:[#allocation6 + $0x3c] sm:$0xf]
    %v96 = vunpack.c.l.b16 %v64
    %v97 = vunpack.c.l.b16 %v65
    %v98 = vunpack.c.l.b16 %v66
    %v99 = vunpack.c.l.b16 %v67
    %v100 = vunpack.c.l.b16 %v68
    %v101 = vunpack.c.l.b16 %v69
    %v102 = vunpack.c.l.b16 %v70
    %v103 = vunpack.c.l.b16 %v71
    %v104 = vpack.c.b16 %v97, %v96
    %v105 = vpack.c.b16 %v99, %v98
    %v106 = vpack.c.b16 %v101, %v100
    %v107 = vpack.c.b16 %v103, %v102
    %v128 = vunpack.c.l.b16 %v72
    %v129 = vunpack.c.l.b16 %v73
    %v130 = vunpack.c.l.b16 %v74
    %v131 = vunpack.c.l.b16 %v75
    %v132 = vunpack.c.l.b16 %v76
    %v133 = vunpack.c.l.b16 %v77
    %v134 = vunpack.c.l.b16 %v78
    %v135 = vunpack.c.l.b16 %v79
    %v136 = vunpack.c.l.b16 %v80
    %v137 = vunpack.c.l.b16 %v81
    %v138 = vunpack.c.l.b16 %v82
    %v139 = vunpack.c.l.b16 %v83
    %v140 = vunpack.c.l.b16 %v84
    %v141 = vunpack.c.l.b16 %v85
    %v142 = vunpack.c.l.b16 %v86
    %v143 = vunpack.c.l.b16 %v87
    %v144 = vpack.c.b16 %v129, %v128
    %v145 = vpack.c.b16 %v131, %v130
    %v146 = vpack.c.b16 %v133, %v132
    %v147 = vpack.c.b16 %v135, %v134
    %v148 = vpack.c.b16 %v137, %v136
    %v149 = vpack.c.b16 %v139, %v138
    %v150 = vpack.c.b16 %v141, %v140
    %v151 = vpack.c.b16 %v143, %v142
    %160 = vmatprep.subr.bf16.mxu0 0
    %161 = vmatpush1.bf16.msra.mxu0 %v144
    %162 = vmatprep.subr.bf16.mxu0 0
    %163 = vmatpush1.bf16.msra.mxu0 %v145
    %164 = vmatprep.subr.bf16.mxu0 0
    %165 = vmatpush1.bf16.msra.mxu0 %v146
    %166 = vmatprep.subr.bf16.mxu0 0
    %167 = vmatpush1.bf16.msra.mxu0 %v147
    %168 = vmatprep.subr.bf16.mxu0 0
    %169 = vmatpush1.bf16.msra.mxu0 %v148
    %170 = vmatprep.subr.bf16.mxu0 0
    %171 = vmatpush1.bf16.msra.mxu0 %v149
    %172 = vmatprep.subr.bf16.mxu0 0
    %173 = vmatpush1.bf16.msra.mxu0 %v150
    %174 = vmatprep.subr.bf16.mxu0 0
    %175 = vmatpush1.bf16.msra.mxu0 %v151
    %176 = vmatprep.subr.bf16.mxu0 0
    %177 = vmatpush1.bf16.msra.mxu0 0
    %178 = vmatprep.subr.bf16.mxu0 0
    %179 = vmatpush1.bf16.msra.mxu0 0
    %180 = vmatprep.subr.bf16.mxu0 0
    %181 = vmatpush1.bf16.msra.mxu0 0
    %182 = vmatprep.subr.bf16.mxu0 0
    %183 = vmatpush1.bf16.msra.mxu0 0
    %184 = vmatprep.subr.bf16.mxu0 0
    %185 = vmatpush1.bf16.msra.mxu0 0
    %186 = vmatprep.subr.bf16.mxu0 0
    %187 = vmatpush1.bf16.msra.mxu0 0
    %188 = vmatprep.subr.bf16.mxu0 0
    %189 = vmatpush1.bf16.msra.mxu0 0
    %190 = vmatprep.subr.bf16.mxu0 0
    %191 = vmatpush1.bf16.msra.mxu0 0
    %192 = vmatprep.mubr.bf16.mxu0 0
    %193 = vmatmul.mubr.bf16.gmra.mrb[0].mxu0 %v104
    %v194 = vpop.f32.mrb[0].mxu0
    %v195 = vadd.f32 0.0, %v194
    %v196 = vpop.f32.mrb[0].mxu0
    %v197 = vpop.f32.mrb[0].mxu0
    %v198 = vadd.f32 0.0, %v197
    %v199 = vpop.f32.mrb[0].mxu0
    %200 = vmatprep.mubr.bf16.mxu0 0
    %201 = vmatmul.mubr.bf16.gmra.mrb[0].mxu0 %v105
    %v202 = vpop.f32.mrb[0].mxu0
    %v203 = vadd.f32 0.0, %v202
    %v204 = vpop.f32.mrb[0].mxu0
    %v205 = vpop.f32.mrb[0].mxu0
    %v206 = vadd.f32 0.0, %v205
    %v207 = vpop.f32.mrb[0].mxu0
    %208 = vmatprep.mubr.bf16.mxu0 0
    %209 = vmatmul.mubr.bf16.gmra.mrb[0].mxu0 %v106
    %v210 = vpop.f32.mrb[0].mxu0
    %v211 = vadd.f32 0.0, %v210
    %v212 = vpop.f32.mrb[0].mxu0
    %v213 = vpop.f32.mrb[0].mxu0
    %v214 = vadd.f32 0.0, %v213
    %v215 = vpop.f32.mrb[0].mxu0
    %216 = vmatprep.mubr.bf16.mxu0 0
    %217 = vmatmul.mubr.bf16.gmra.mrb[0].mxu0 %v107
    %v218 = vpop.f32.mrb[0].mxu0
    %v219 = vadd.f32 0.0, %v218
    %v220 = vpop.f32.mrb[0].mxu0
    %v221 = vpop.f32.mrb[0].mxu0
    %v222 = vadd.f32 0.0, %v221
    %v223 = vpop.f32.mrb[0].mxu0
    %224 = vdwg.mxu0
    %v225 = vadd.f32 %v56, %v195
    %v226 = vadd.f32 %v57, %v198
    %v227 = vadd.f32 %v58, %v203
    %v228 = vadd.f32 %v59, %v206
    %v229 = vadd.f32 %v60, %v211
    %v230 = vadd.f32 %v61, %v214
    %v231 = vadd.f32 %v62, %v219
    %v232 = vadd.f32 %v63, %v222
    %233 = vst [vmem:[#allocation2] sm:$0xff] %v225
    %234 = vst [vmem:[#allocation2 + $0x8] sm:$0xff] %v226
    %235 = vst [vmem:[#allocation2 + $0x10] sm:$0xff] %v227
    %236 = vst [vmem:[#allocation2 + $0x18] sm:$0xff] %v228
    %237 = vst [vmem:[#allocation2 + $0x20] sm:$0xff] %v229
    %238 = vst [vmem:[#allocation2 + $0x28] sm:$0xff] %v230
    %239 = vst [vmem:[#allocation2 + $0x30] sm:$0xff] %v231
    %240 = vst [vmem:[#allocation2 + $0x38] sm:$0xff] %v232
    // Predicated region
    $region26: #{tpu_custom_call.1} parent=1 // pred_check
      %p241 = pneg %p44
    $region27: #{tpu_custom_call.1} parent=1 // pred_check_branch
      %243 = sbr.rel (%p241) target = $region29
    $region28: #{tpu_custom_call.1} parent=1 // pred_region
      %v244 = vld [vmem:[#allocation2] sm:$0xff]
      %v245 = vld [vmem:[#allocation2 + $0x8] sm:$0xff]
      %v246 = vld [vmem:[#allocation2 + $0x10] sm:$0xff]
      %v247 = vld [vmem:[#allocation2 + $0x18] sm:$0xff]
      %v248 = vld [vmem:[#allocation2 + $0x20] sm:$0xff]
      %v249 = vld [vmem:[#allocation2 + $0x28] sm:$0xff]
      %v250 = vld [vmem:[#allocation2 + $0x30] sm:$0xff]
      %v251 = vld [vmem:[#allocation2 + $0x38] sm:$0xff]
      %v252 = vld [vmem:[%s2] sm:$0x1]
      %v254 = vlaneseq
      %v255 = vshrl.u32 %v254, 7
      %v256 = vsub.s32 0, %v255
      %v257 = vrot.slane %v252, %v256
      %v259 = vadd.f32 %v244, %v257
      %v260 = vadd.f32 %v245, %v257
      %v261 = vadd.f32 %v246, %v257
      %v262 = vadd.f32 %v247, %v257
      %v263 = vadd.f32 %v248, %v257
      %v264 = vadd.f32 %v249, %v257
      %v265 = vadd.f32 %v250, %v257
      %v266 = vadd.f32 %v251, %v257
      %267 = vst [vmem:[#allocation8] sm:$0xff] %v259
      %268 = vst [vmem:[#allocation8 + $0x8] sm:$0xff] %v260
      %269 = vst [vmem:[#allocation8 + $0x10] sm:$0xff] %v261
      %270 = vst [vmem:[#allocation8 + $0x18] sm:$0xff] %v262
      %271 = vst [vmem:[#allocation8 + $0x20] sm:$0xff] %v263
      %272 = vst [vmem:[#allocation8 + $0x28] sm:$0xff] %v264
      %273 = vst [vmem:[#allocation8 + $0x30] sm:$0xff] %v265
      %274 = vst [vmem:[#allocation8 + $0x38] sm:$0xff] %v266
    $region29: #{tpu_custom_call.1} parent=1 // pred_fallthru
      _
    // Predicated region
    $region30: #{tpu_custom_call.1} parent=1 // pred_check
      _
    $region31: #{tpu_custom_call.1} parent=1 // pred_check_branch
      %276 = sbr.rel (0) target = $region33
    $region32: #{tpu_custom_call.1} parent=1 // pred_region
      %s278 = ssub.s32 1024, 1024
      %279 = vsyncadd [#allocation5], %s278
      %s280 = sshll.u32 [#allocation8], 4
      %s281 = int_to_ptr.vmem [resolvable:$true] %s280
      %286 = dma.vmem_to_hbm [thread:$0]  %s281, 1024, %s3, [#allocation5], 128, 128, 8
    $region33: #{tpu_custom_call.1} parent=1 // pred_fallthru
      _
    // Predicated region
    $region34: #{tpu_custom_call.1} parent=1 // pred_check
      _
    $region35: #{tpu_custom_call.1} parent=1 // pred_check_branch
      %288 = sbr.rel (0) target = $region37
    $region36: #{tpu_custom_call.1} parent=1 // pred_region
      %289 = dma.done [#allocation5], 1024
    $region37: #{tpu_custom_call.1} parent=1 // pred_fallthru
      _
    %290 = vsyncpa [#allocation4], 1
    %291 = vsyncpa [#allocation7], 1
    %292 = vsyncpa [#allocation5], 1

</llo_original>
